<compile_context>
chip_gen: v7x
topology: tpu7x:2x2x1
jax: 0.10.0
libtpu: 0.0.40
codegen_flags: <defaults>
</compile_context>

<pallas_src>
import numpy as np

import jax
import jax.numpy as jnp
from jax.experimental import pallas as pl
from jax.experimental.pallas import tpu as pltpu


# ---------------------------------------------------------------------------
# Bilinear weight construction (host-side, tiny).
# Matches torchvision F.resize(interpolation=bilinear, antialias=False), i.e.
# upsample_bilinear2d with align_corners=False:
#   src = max((dst + 0.5) * in/out - 0.5, 0);  i0 = floor(src);
#   i1 = min(i0 + 1, in - 1);  w1 = clamp(src - i0, 0, 1);  w0 = 1 - w1
# ---------------------------------------------------------------------------
def _bilinear_gather(dst_idx, in_size, out_size):
    dst = np.asarray(dst_idx, dtype=np.float64)
    scale = in_size / out_size
    src = np.maximum((dst + 0.5) * scale - 0.5, 0.0)
    i0 = np.minimum(np.floor(src).astype(np.int64), in_size - 1)
    i1 = np.minimum(i0 + 1, in_size - 1)
    w1 = np.clip(src - i0, 0.0, 1.0)
    w0 = 1.0 - w1
    return i0, i1, w0.astype(np.float32), w1.astype(np.float32)


def _build_crop_weights(in_size, out_size, start, crop):
    """Weights W (crop, band) and band start `lo` such that
    (bilinear-resize x to out_size, then take rows [start, start+crop)) ==
    W @ x[lo : lo + band]."""
    dst = np.arange(start, start + crop)
    i0, i1, w0, w1 = _bilinear_gather(dst, in_size, out_size)
    lo = int(i0.min())
    hi = int(i1.max())
    band = hi - lo + 1
    w = np.zeros((crop, band), dtype=np.float32)
    rows = np.arange(crop)
    np.add.at(w, (rows, i0 - lo), w0)   # accumulate so i0 == i1 still sums to 1
    np.add.at(w, (rows, i1 - lo), w1)
    return w, lo


# ---------------------------------------------------------------------------
# Pallas kernel: fused (bilinear resize -> crop) over channel planes.
#   out[c] = Ry @ plane[c] @ RxT
# ---------------------------------------------------------------------------
def _fused_resize_crop(plane_stacks, ry, rxT):
    """plane_stacks: list of (n_planes, band_h, band_w) arrays (same shapes).
    Returns a list of (n_planes, crop_h, crop_w) float32 arrays.
    All stacks are processed in ONE pallas_call (single launch / pipeline)."""
    n_stacks = len(plane_stacks)
    n_planes, band_h, band_w = plane_stacks[0].shape
    crop_h, crop_w = ry.shape[0], rxT.shape[1]

    def kernel(*refs):
        ry_ref = refs[n_stacks]
        rxT_ref = refs[n_stacks + 1]
        for s in range(n_stacks):                          # unrolled, n_stacks small
            plane = refs[s][0].astype(jnp.float32)         # (band_h, band_w)
            tmp = jnp.dot(ry_ref[...], plane,
                          preferred_element_type=jnp.float32)   # (crop_h, band_w)
            out = jnp.dot(tmp, rxT_ref[...],
                          preferred_element_type=jnp.float32)   # (crop_h, crop_w)
            refs[n_stacks + 2 + s][0] = out

    # One full channel plane per grid step: large, lane-dense blocks (last dim
    # = full band width / crop width), double-buffered by the BlockSpec
    # pipeline. Typical optical-flow plane bands (<= ~1Kx1K f32 ~= 4 MiB) fit
    # comfortably under the default scoped VMEM on v5e/v6e/v7x; only for much
    # larger planes would crop_h additionally need tiling.
    plane_spec = pl.BlockSpec((1, band_h, band_w), lambda c: (c, 0, 0))
    out_spec = pl.BlockSpec((1, crop_h, crop_w), lambda c: (c, 0, 0))

    outs = pl.pallas_call(
        kernel,
        out_shape=tuple(
            jax.ShapeDtypeStruct((n_planes, crop_h, crop_w), jnp.float32)
            for _ in range(n_stacks)),
        grid_spec=pltpu.PrefetchScalarGridSpec(
            num_scalar_prefetch=0,
            grid=(n_planes,),
            in_specs=[plane_spec] * n_stacks + [
                pl.BlockSpec((crop_h, band_h), lambda c: (0, 0)),
                pl.BlockSpec((band_w, crop_w), lambda c: (0, 0)),
            ],
            out_specs=[out_spec] * n_stacks,
        ),
        compiler_params=pltpu.CompilerParams(
            dimension_semantics=("parallel",),   # channels shard across TCs (megacore)
        ),
    )(*plane_stacks, ry, rxT)
    return list(outs)


def _cast_like(x_f32, ref_dtype):
    if jnp.issubdtype(ref_dtype, jnp.integer):
        info = jnp.iinfo(ref_dtype)
        return jnp.clip(jnp.round(x_f32), info.min, info.max).astype(ref_dtype)
    return x_f32.astype(ref_dtype)


def _resize_sparse_flow(flow, valid_flow_mask, scale_x, scale_y):
    # TODO(synk): the data-dependent scatter of the sparse flow resize has no
    # clean Pallas TPU equivalent; implemented as a JAX scatter (mode="drop").
    _, h, w = flow.shape
    h_new = int(round(h * scale_y))
    w_new = int(round(w * scale_x))

    ii, jj = jnp.meshgrid(jnp.arange(h), jnp.arange(w), indexing="ij")
    ii = ii.reshape(-1)
    jj = jj.reshape(-1)
    valid = valid_flow_mask.reshape(-1).astype(bool)

    ii_new = jnp.round(ii.astype(jnp.float32) * scale_y).astype(jnp.int32)
    jj_new = jnp.round(jj.astype(jnp.float32) * scale_x).astype(jnp.int32)
    within = (ii_new >= 0) & (ii_new < h_new) & (jj_new >= 0) & (jj_new < w_new)
    keep = valid & within

    # Dropped pixels are routed to an out-of-bounds target and discarded by
    # mode="drop" (mirrors the boolean filtering in the torch reference).
    ii_t = jnp.where(keep, ii_new, h_new)
    jj_t = jnp.where(keep, jj_new, w_new)

    vals = flow.reshape(2, -1) * jnp.asarray([scale_x, scale_y], flow.dtype)[:, None]

    flow_new = jnp.zeros((2, h_new, w_new), flow.dtype)
    flow_new = flow_new.at[:, ii_t, jj_t].set(vals, mode="drop")
    valid_new = jnp.zeros((h_new, w_new), valid_flow_mask.dtype)
    valid_new = valid_new.at[ii_t, jj_t].set(
        jnp.ones((), valid_flow_mask.dtype), mode="drop")
    return flow_new, valid_new


class RandomResizeAndCrop:
    """JAX/Pallas port of references/optical_flow/transforms.RandomResizeAndCrop."""

    def __init__(self, crop_size, min_scale=-0.2, max_scale=0.5, stretch_prob=0.8):
        self.crop_size = crop_size
        self.min_scale = min_scale
        self.max_scale = max_scale
        self.stretch_prob = stretch_prob
        self.resize_prob = 0.8
        self.max_stretch = 0.2
        self.last_params = None   # random params of the last forward (for tests)

    def __call__(self, img1, img2, flow, valid_flow_mask, *, rng_key):
        h, w = img1.shape[-2:]
        crop_h, crop_w = self.crop_size

        # ---- random draws (shape-affecting -> host-side, like torch .item()) ----
        k_scale, k_sp, k_sx, k_sy, k_rp, k_y0, k_x0 = jax.random.split(rng_key, 7)
        min_scale_bound = max((crop_h + 8) / h, (crop_w + 8) / w)
        scale = 2.0 ** float(jax.random.uniform(
            k_scale, (), minval=self.min_scale, maxval=self.max_scale))
        scale_x = scale_y = scale
        if float(jax.random.uniform(k_sp, ())) < self.stretch_prob:
            scale_x *= 2.0 ** float(jax.random.uniform(
                k_sx, (), minval=-self.max_stretch, maxval=self.max_stretch))
            scale_y *= 2.0 ** float(jax.random.uniform(
                k_sy, (), minval=-self.max_stretch, maxval=self.max_stretch))
        scale_x = max(scale_x, min_scale_bound)
        scale_y = max(scale_y, min_scale_bound)
        new_h = int(round(h * scale_y))
        new_w = int(round(w * scale_x))
        do_resize = float(jax.random.uniform(k_rp, ())) < self.resize_prob

        out_h = new_h if do_resize else h
        out_w = new_w if do_resize else w
        assert out_h - crop_h >= 1 and out_w - crop_w >= 1, "crop larger than image"
        y0 = int(jax.random.randint(k_y0, (), 0, out_h - crop_h))
        x0 = int(jax.random.randint(k_x0, (), 0, out_w - crop_w))

        self.last_params = dict(scale_x=scale_x, scale_y=scale_y,
                                do_resize=do_resize, out_h=out_h, out_w=out_w,
                                y0=y0, x0=x0)

        # ---- fused resize+crop of the two images (ONE Pallas call) ----
        # When do_resize is False the weight matrices degenerate to one-hot
        # rows, i.e. the same kernel performs a plain crop.
        wy, row_lo = _build_crop_weights(h, out_h, y0, crop_h)
        wx, col_lo = _build_crop_weights(w, out_w, x0, crop_w)
        band_h, band_w = wy.shape[1], wx.shape[1]
        ry = jnp.asarray(wy)           # (crop_h, band_h)
        rxT = jnp.asarray(wx.T)        # (band_w, crop_w)

        sl = (..., slice(row_lo, row_lo + band_h), slice(col_lo, col_lo + band_w))
        out1_f32, out2_f32 = _fused_resize_crop([img1[sl], img2[sl]], ry, rxT)
        img1_out = _cast_like(out1_f32, img1.dtype)
        img2_out = _cast_like(out2_f32, img2.dtype)

        # ---- flow / mask ----
        if do_resize:
            if valid_flow_mask is None:
                # Dense flow: same fused resize+crop kernel, then scale by (sx, sy).
                (flow_f32,) = _fused_resize_crop([flow[sl]], ry, rxT)
                flow_out = (flow_f32 * jnp.asarray(
                    [scale_x, scale_y], jnp.float32)[:, None, None]).astype(flow.dtype)
                mask_out = None
            else:
                flow_full, mask_full = _resize_sparse_flow(
                    flow, valid_flow_mask, scale_x=scale_x, scale_y=scale_y)
                flow_out = flow_full[:, y0:y0 + crop_h, x0:x0 + crop_w]
                mask_out = mask_full[y0:y0 + crop_h, x0:x0 + crop_w]
        else:
            flow_out = flow[:, y0:y0 + crop_h, x0:x0 + crop_w]
            mask_out = (None if valid_flow_mask is None
                        else valid_flow_mask[y0:y0 + crop_h, x0:x0 + crop_w])

        return img1_out, img2_out, flow_out, mask_out


# ---------------------------------------------------------------------------
# Plain-JAX reference (gather form) used only for the sanity check in __main__.
# ---------------------------------------------------------------------------
def _ref_resize_bilinear(x, out_h, out_w):
    in_h, in_w = x.shape[-2:]
    i0, i1, w0, w1 = _bilinear_gather(np.arange(out_h), in_h, out_h)
    j0, j1, v0, v1 = _bilinear_gather(np.arange(out_w), in_w, out_w)
    x = x.astype(jnp.float32)
    rows = x[..., i0, :] * w0[:, None] + x[..., i1, :] * w1[:, None]
    return rows[..., :, j0] * v0 + rows[..., :, j1] * v1


if __name__ == "__main__":
    key = jax.random.PRNGKey(0)
    k_i1, k_i2, k_fl, k_m, k_fwd = jax.random.split(key, 5)

    C, H, W = 3, 48, 64
    crop_size = (24, 32)

    img1 = jax.random.uniform(k_i1, (C, H, W), jnp.float32)      # images in [0, 1]
    img2 = jax.random.uniform(k_i2, (C, H, W), jnp.float32)
    flow = 4.0 * jax.random.normal(k_fl, (2, H, W), jnp.float32)
    valid_flow_mask = jax.random.bernoulli(k_m, 0.7, (H, W))

    transform = RandomResizeAndCrop(crop_size)
    out1, out2, out_flow, out_mask = transform(
        img1, img2, flow, valid_flow_mask, rng_key=k_fwd)
    jax.block_until_ready((out1, out2, out_flow, out_mask))

    ch, cw = crop_size
    assert out1.shape == (C, ch, cw) and out1.dtype == img1.dtype
    assert out2.shape == (C, ch, cw) and out2.dtype == img2.dtype
    assert out_flow.shape == (2, ch, cw) and out_flow.dtype == flow.dtype
    assert out_mask.shape == (ch, cw) and out_mask.dtype == valid_flow_mask.dtype

    # Check the fused Pallas resize+crop against a plain-JAX reference using
    # the random parameters the transform actually drew.
    p = transform.last_params

    def ref_resize_crop(x):
        x = x.astype(jnp.float32)
        if p["do_resize"]:
            x = _ref_resize_bilinear(x, p["out_h"], p["out_w"])
        return x[..., p["y0"]:p["y0"] + ch, p["x0"]:p["x0"] + cw]

    assert jnp.allclose(out1, ref_resize_crop(img1), atol=2e-2)
    assert jnp.allclose(out2, ref_resize_crop(img2), atol=2e-2)

    if p["do_resize"]:
        # Sparse-flow invariant: positions not marked valid carry zero flow.
        assert bool(jnp.all(jnp.where(out_mask[None], True, out_flow == 0.0)))

    print("KERNEL_OK")
</pallas_src>

<mosaic_0001>
module attributes {stable_mosaic.version = 11 : i64} {
  func.func @kernel(%arg0: i32, %arg1: memref<1x19x23xf32, #tpu.memory_space<vmem>>, %arg2: memref<1x19x23xf32, #tpu.memory_space<vmem>>, %arg3: memref<24x19xf32, #tpu.memory_space<vmem>>, %arg4: memref<23x32xf32, #tpu.memory_space<vmem>>, %arg5: memref<1x24x32xf32, #tpu.memory_space<vmem>>, %arg6: memref<1x24x32xf32, #tpu.memory_space<vmem>>) attributes {dimension_semantics = [#tpu.dimension_semantics<parallel>], iteration_bounds = array<i64: 3>, scalar_prefetch = 0 : i64, scratch_operands = 0 : i64, tpu.core_type = #tpu.core_type<tc>, window_params = [{transform_indices = @transform_0, window_bounds = array<i64: 1, 19, 23>}, {transform_indices = @transform_1, window_bounds = array<i64: 1, 19, 23>}, {pipeline_mode = #tpu.pipeline_mode<synchronous>, transform_indices = @transform_2, window_bounds = array<i64: 24, 19>}, {pipeline_mode = #tpu.pipeline_mode<synchronous>, transform_indices = @transform_3, window_bounds = array<i64: 23, 32>}, {transform_indices = @transform_4, window_bounds = array<i64: 1, 24, 32>}, {transform_indices = @transform_5, window_bounds = array<i64: 1, 24, 32>}]} {
    %c0 = arith.constant 0 : index
    %c0_0 = arith.constant 0 : index
    %c0_1 = arith.constant 0 : index
    %0 = vector.load %arg1[%c0, %c0_0, %c0_1] : memref<1x19x23xf32, #tpu.memory_space<vmem>>, vector<1x19x23xf32>
    %1 = vector.shape_cast %0 : vector<1x19x23xf32> to vector<19x23xf32>
    %c0_2 = arith.constant 0 : index
    %c0_3 = arith.constant 0 : index
    %2 = vector.load %arg3[%c0_2, %c0_3] : memref<24x19xf32, #tpu.memory_space<vmem>>, vector<24x19xf32>
    %cst = arith.constant dense<0.000000e+00> : vector<24x23xf32>
    %3 = tpu.matmul %2, %1, %cst {dimension_numbers = #tpu.dot_dimension_numbers<[1], [0], [0], [1], [0, 0, 1, 1], [], []>} : vector<24x19xf32>, vector<19x23xf32>, vector<24x23xf32> -> vector<24x23xf32>
    %c0_4 = arith.constant 0 : index
    %c0_5 = arith.constant 0 : index
    %4 = vector.load %arg4[%c0_4, %c0_5] : memref<23x32xf32, #tpu.memory_space<vmem>>, vector<23x32xf32>
    %cst_6 = arith.constant dense<0.000000e+00> : vector<24x32xf32>
    %5 = tpu.matmul %3, %4, %cst_6 {dimension_numbers = #tpu.dot_dimension_numbers<[1], [0], [0], [1], [0, 0, 1, 1], [], []>} : vector<24x23xf32>, vector<23x32xf32>, vector<24x32xf32> -> vector<24x32xf32>
    %c0_7 = arith.constant 0 : index
    %c0_8 = arith.constant 0 : index
    %c0_9 = arith.constant 0 : index
    %6 = vector.load %arg5[%c0_7, %c0_8, %c0_9] : memref<1x24x32xf32, #tpu.memory_space<vmem>>, vector<1x24x32xf32>
    %7 = vector.shape_cast %6 : vector<1x24x32xf32> to vector<24x32xf32>
    %8 = vector.shape_cast %5 : vector<24x32xf32> to vector<1x24x32xf32>
    tpu.vector_store %arg5[%c0_7, %c0_8, %c0_9], %8 {strides = array<i32>} : memref<1x24x32xf32, #tpu.memory_space<vmem>>, vector<1x24x32xf32>,
    %c0_10 = arith.constant 0 : index
    %c0_11 = arith.constant 0 : index
    %c0_12 = arith.constant 0 : index
    %9 = vector.load %arg2[%c0_10, %c0_11, %c0_12] : memref<1x19x23xf32, #tpu.memory_space<vmem>>, vector<1x19x23xf32>
    %10 = vector.shape_cast %9 : vector<1x19x23xf32> to vector<19x23xf32>
    %c0_13 = arith.constant 0 : index
    %c0_14 = arith.constant 0 : index
    %11 = vector.load %arg3[%c0_13, %c0_14] : memref<24x19xf32, #tpu.memory_space<vmem>>, vector<24x19xf32>
    %cst_15 = arith.constant dense<0.000000e+00> : vector<24x23xf32>
    %12 = tpu.matmul %11, %10, %cst_15 {dimension_numbers = #tpu.dot_dimension_numbers<[1], [0], [0], [1], [0, 0, 1, 1], [], []>} : vector<24x19xf32>, vector<19x23xf32>, vector<24x23xf32> -> vector<24x23xf32>
    %c0_16 = arith.constant 0 : index
    %c0_17 = arith.constant 0 : index
    %13 = vector.load %arg4[%c0_16, %c0_17] : memref<23x32xf32, #tpu.memory_space<vmem>>, vector<23x32xf32>
    %cst_18 = arith.constant dense<0.000000e+00> : vector<24x32xf32>
    %14 = tpu.matmul %12, %13, %cst_18 {dimension_numbers = #tpu.dot_dimension_numbers<[1], [0], [0], [1], [0, 0, 1, 1], [], []>} : vector<24x23xf32>, vector<23x32xf32>, vector<24x32xf32> -> vector<24x32xf32>
    %c0_19 = arith.constant 0 : index
    %c0_20 = arith.constant 0 : index
    %c0_21 = arith.constant 0 : index
    %15 = vector.load %arg6[%c0_19, %c0_20, %c0_21] : memref<1x24x32xf32, #tpu.memory_space<vmem>>, vector<1x24x32xf32>
    %16 = vector.shape_cast %15 : vector<1x24x32xf32> to vector<24x32xf32>
    %17 = vector.shape_cast %14 : vector<24x32xf32> to vector<1x24x32xf32>
    tpu.vector_store %arg6[%c0_19, %c0_20, %c0_21], %17 {strides = array<i32>} : memref<1x24x32xf32, #tpu.memory_space<vmem>>, vector<1x24x32xf32>,
    return
  }
  func.func @transform_0(%arg0: i32) -> (i32, i32, i32) {
    %c0_i32 = arith.constant 0 : i32
    %c0_i32_0 = arith.constant 0 : i32
    %c0_i32_1 = arith.constant 0 : i32
    return %arg0, %c0_i32, %c0_i32_0 : i32, i32, i32
  }
  func.func @transform_1(%arg0: i32) -> (i32, i32, i32) {
    %c0_i32 = arith.constant 0 : i32
    %c0_i32_0 = arith.constant 0 : i32
    %c0_i32_1 = arith.constant 0 : i32
    return %arg0, %c0_i32, %c0_i32_0 : i32, i32, i32
  }
  func.func @transform_2(%arg0: i32) -> (i32, i32) {
    %c0_i32 = arith.constant 0 : i32
    %c0_i32_0 = arith.constant 0 : i32
    %c0_i32_1 = arith.constant 0 : i32
    return %c0_i32, %c0_i32_0 : i32, i32
  }
  func.func @transform_3(%arg0: i32) -> (i32, i32) {
    %c0_i32 = arith.constant 0 : i32
    %c0_i32_0 = arith.constant 0 : i32
    %c0_i32_1 = arith.constant 0 : i32
    return %c0_i32, %c0_i32_0 : i32, i32
  }
  func.func @transform_4(%arg0: i32) -> (i32, i32, i32) {
    %c0_i32 = arith.constant 0 : i32
    %c0_i32_0 = arith.constant 0 : i32
    %c0_i32_1 = arith.constant 0 : i32
    return %arg0, %c0_i32, %c0_i32_0 : i32, i32, i32
  }
  func.func @transform_5(%arg0: i32) -> (i32, i32, i32) {
    %c0_i32 = arith.constant 0 : i32
    %c0_i32_0 = arith.constant 0 : i32
    %c0_i32_1 = arith.constant 0 : i32
    return %arg0, %c0_i32, %c0_i32_0 : i32, i32, i32
  }
}

</mosaic_0001>

<llo_original>
// kernel: tpu_custom_call.1
$region0: #{tpu_custom_call.1}
  #allocation0 [shape = 'u32[]', space=smem, size = 0x4, offset = 0x4, fixed_abs, tag = 'smem constant byte address 0x4 - core index']
  #allocation1 [shape = 'u32[144,128]{1,0:T(1,128)}', space=vmem, size = 0x12000, scoped, tag = 'internal scratch']
  %s0 = inlined_call_operand.hbm [shape: f32[3,19,23], index: 0, kind: input, shape index: {}]
  %s1 = inlined_call_operand.hbm [shape: f32[3,19,23], index: 1, kind: input, shape index: {}]
  %s2 = inlined_call_operand.hbm [shape: f32[24,19], index: 2, kind: input, shape index: {}]
  %s3 = inlined_call_operand.hbm [shape: f32[23,32], index: 3, kind: input, shape index: {}]
  %s4 = inlined_call_operand.hbm [shape: f32[3,24,32], index: 4, kind: output, shape index: {0}]
  %s5 = inlined_call_operand.hbm [shape: f32[3,24,32], index: 5, kind: output, shape index: {1}]
  %6 = xla_tuple %s4, %s5
  %s7 = sld [smem:[#allocation0]]
  $region73: #{tpu_custom_call.1} parent=0
    _
  %s9 = ssub.s32 1, %s7
  %s10 = scalar_select 0, %s9, %s7
  $region1: #{tpu_custom_call.1} parent=0
    #allocation2 [shape = 'u8[24576]{0}', space=vmem, size = 0x6000, scoped, tag = 'input window, operand 0']
    #allocation3 [shape = 's32[2]{0}', space=sflag, size = 0x8, scoped, tag = 'scoped memory for tpu_custom_call.1']
    #allocation4 [shape = 's32[2]{0}', space=sflag, size = 0x8, scoped, tag = 'scoped memory for tpu_custom_call.1']
    #allocation5 [shape = 'u8[24576]{0}', space=vmem, size = 0x6000, scoped, tag = 'input window, operand 1']
    #allocation6 [shape = 's32[2]{0}', space=sflag, size = 0x8, scoped, tag = 'scoped memory for tpu_custom_call.1']
    #allocation7 [shape = 'u8[12288]{0}', space=vmem, size = 0x3000, scoped, tag = 'input window, operand 2, single buffered']
    #allocation8 [shape = 'u8[12288]{0}', space=vmem, size = 0x3000, scoped, tag = 'input window, operand 3, single buffered']
    #allocation9 [shape = 's32[1]{0}', space=sflag, size = 0x4, scoped, tag = 'scoped memory for tpu_custom_call.1']
    #allocation10 [shape = 'u8[24576]{0}', space=vmem, size = 0x6000, scoped, tag = 'output window, operand 0']
    #allocation11 [shape = 'u8[24576]{0}', space=vmem, size = 0x6000, scoped, tag = 'output window, operand 1']
    #allocation12 [shape = 's32[2]{0}', space=sflag, size = 0x8, scoped, tag = 'scoped memory for tpu_custom_call.1']
    %11 = vsyncpa [#allocation3], 0
    %s12 = scalar_lea.sflag [#allocation3], 1
    %13 = vsyncpa %s12, 0
    %14 = vsyncpa [#allocation6], 0
    %s15 = scalar_lea.sflag [#allocation6], 1
    %16 = vsyncpa %s15, 0
    %17 = vsyncpa [#allocation9], 0
    %18 = vsyncpa [#allocation4], 0
    %s19 = scalar_lea.sflag [#allocation4], 1
    %20 = vsyncpa %s19, 0
    %21 = vsyncpa [#allocation12], 0
    %s22 = scalar_lea.sflag [#allocation12], 1
    %23 = vsyncpa %s22, 0
    loop: start=0, step=1, limit=5
    $region2: #{tpu_custom_call.1} parent=1 // loop_pre_header
      _
    $region3: #{tpu_custom_call.1} parent=1 // loop_header
      %s25 = sphi 0, %s29
      %p26 = scmp.ge.s32.totalorder %s25, 5
      %s35 = sphi 0, %s37
      %s38 = sphi 0, %s35
      %s39 = sphi 0, %s38
      %s55 = sphi 0, %s39
      %s61 = sphi 0, %s63
      %s64 = sphi 0, %s61
      %s65 = sphi 0, %s64
      %s81 = sphi 0, %s65
      %s85 = sphi 0, %s85
      %s87 = sphi 0, %s85
      %s88 = sphi 0, %s87
      %s102 = sphi 0, %s88
      %s106 = sphi 0, %s106
      %s108 = sphi 0, %s106
      %s109 = sphi 0, %s108
      %s123 = sphi 0, %s109
      %s129 = sphi 0, %s131
      %s132 = sphi 0, %s129
      %s133 = sphi 0, %s132
      %s149 = sphi 0, %s133
      %s155 = sphi 0, %s157
      %s158 = sphi 0, %s155
      %s159 = sphi 0, %s158
      %s175 = sphi 0, %s159
    $region4: #{tpu_custom_call.1} parent=1 // loop_header_branch
      %28 = sbr.rel (%p26) target = $region8
    $region5: #{tpu_custom_call.1} parent=1 // loop_body
      %s30 = ssub.s32 %s25, 1
      %s31 = ssub.s32 %s25, 2
      %s32 = sadd.s32 %s25, 1
      %s33 = ssub.s32 %s25, %s32
      %p34 = scmp.eq.s32.totalorder %s33, 0
      %s36 = sadd.s32 %s35, 1
      %s37 = scalar_select %p34, %s35, %s36
      %p40 = pneg %p34
      %p41 = scmp.eq.s32.totalorder %s25, 2
      %p42 = por %p40, %p41
      %p43 = scmp.ne.s32.totalorder %s35, %s38
      %p44 = scmp.eq.s32.totalorder %s25, 0
      %p45 = por %p43, %p44
      %p46 = scmp.ne.s32.totalorder %s35, %s38
      %p47 = scmp.eq.s32.totalorder %s30, 2
      %p48 = por %p46, %p47
      %p49 = scmp.ne.s32.totalorder %s38, %s39
      %p50 = scmp.eq.s32.totalorder %s30, 0
      %p51 = por %p49, %p50
      %p52 = scmp.ne.s32.totalorder %s38, %s39
      %p53 = scmp.eq.s32.totalorder %s31, 2
      %p54 = por %p52, %p53
      %p56 = scmp.ne.s32.totalorder %s39, %s55
      %p57 = scmp.eq.s32.totalorder %s31, 0
      %p58 = por %p56, %p57
      %s59 = ssub.s32 %s25, %s32
      %p60 = scmp.eq.s32.totalorder %s59, 0
      %s62 = sadd.s32 %s61, 1
      %s63 = scalar_select %p60, %s61, %s62
      %p66 = pneg %p60
      %p67 = scmp.eq.s32.totalorder %s25, 2
      %p68 = por %p66, %p67
      %p69 = scmp.ne.s32.totalorder %s61, %s64
      %p70 = scmp.eq.s32.totalorder %s25, 0
      %p71 = por %p69, %p70
      %p72 = scmp.ne.s32.totalorder %s61, %s64
      %p73 = scmp.eq.s32.totalorder %s30, 2
      %p74 = por %p72, %p73
      %p75 = scmp.ne.s32.totalorder %s64, %s65
      %p76 = scmp.eq.s32.totalorder %s30, 0
      %p77 = por %p75, %p76
      %p78 = scmp.ne.s32.totalorder %s64, %s65
      %p79 = scmp.eq.s32.totalorder %s31, 2
      %p80 = por %p78, %p79
      %p82 = scmp.ne.s32.totalorder %s65, %s81
      %p83 = scmp.eq.s32.totalorder %s31, 0
      %p84 = por %p82, %p83
      %s86 = sadd.s32 %s85, 1
      %p89 = scmp.eq.s32.totalorder %s25, 2
      %p90 = scmp.ne.s32.totalorder %s85, %s87
      %p91 = scmp.eq.s32.totalorder %s25, 0
      %p92 = por %p90, %p91
      %p93 = scmp.ne.s32.totalorder %s85, %s87
      %p94 = scmp.eq.s32.totalorder %s30, 2
      %p95 = por %p93, %p94
      %p96 = scmp.ne.s32.totalorder %s87, %s88
      %p97 = scmp.eq.s32.totalorder %s30, 0
      %p98 = por %p96, %p97
      %p99 = scmp.ne.s32.totalorder %s87, %s88
      %p100 = scmp.eq.s32.totalorder %s31, 2
      %p101 = por %p99, %p100
      %p103 = scmp.ne.s32.totalorder %s88, %s102
      %p104 = scmp.eq.s32.totalorder %s31, 0
      %p105 = por %p103, %p104
      %s107 = sadd.s32 %s106, 1
      %p110 = scmp.eq.s32.totalorder %s25, 2
      %p111 = scmp.ne.s32.totalorder %s106, %s108
      %p112 = scmp.eq.s32.totalorder %s25, 0
      %p113 = por %p111, %p112
      %p114 = scmp.ne.s32.totalorder %s106, %s108
      %p115 = scmp.eq.s32.totalorder %s30, 2
      %p116 = por %p114, %p115
      %p117 = scmp.ne.s32.totalorder %s108, %s109
      %p118 = scmp.eq.s32.totalorder %s30, 0
      %p119 = por %p117, %p118
      %p120 = scmp.ne.s32.totalorder %s108, %s109
      %p121 = scmp.eq.s32.totalorder %s31, 2
      %p122 = por %p120, %p121
      %p124 = scmp.ne.s32.totalorder %s109, %s123
      %p125 = scmp.eq.s32.totalorder %s31, 0
      %p126 = por %p124, %p125
      %s127 = ssub.s32 %s25, %s32
      %p128 = scmp.eq.s32.totalorder %s127, 0
      %s130 = sadd.s32 %s129, 1
      %s131 = scalar_select %p128, %s129, %s130
      %p134 = pneg %p128
      %p135 = scmp.eq.s32.totalorder %s25, 2
      %p136 = por %p134, %p135
      %p137 = scmp.ne.s32.totalorder %s129, %s132
      %p138 = scmp.eq.s32.totalorder %s25, 0
      %p139 = por %p137, %p138
      %p140 = scmp.ne.s32.totalorder %s129, %s132
      %p141 = scmp.eq.s32.totalorder %s30, 2
      %p142 = por %p140, %p141
      %p143 = scmp.ne.s32.totalorder %s132, %s133
      %p144 = scmp.eq.s32.totalorder %s30, 0
      %p145 = por %p143, %p144
      %p146 = scmp.ne.s32.totalorder %s132, %s133
      %p147 = scmp.eq.s32.totalorder %s31, 2
      %p148 = por %p146, %p147
      %p150 = scmp.ne.s32.totalorder %s133, %s149
      %p151 = scmp.eq.s32.totalorder %s31, 0
      %p152 = por %p150, %p151
      %s153 = ssub.s32 %s25, %s32
      %p154 = scmp.eq.s32.totalorder %s153, 0
      %s156 = sadd.s32 %s155, 1
      %s157 = scalar_select %p154, %s155, %s156
      %p160 = pneg %p154
      %p161 = scmp.eq.s32.totalorder %s25, 2
      %p162 = por %p160, %p161
      %p163 = scmp.ne.s32.totalorder %s155, %s158
      %p164 = scmp.eq.s32.totalorder %s25, 0
      %p165 = por %p163, %p164
      %p166 = scmp.ne.s32.totalorder %s155, %s158
      %p167 = scmp.eq.s32.totalorder %s30, 2
      %p168 = por %p166, %p167
      %p169 = scmp.ne.s32.totalorder %s158, %s159
      %p170 = scmp.eq.s32.totalorder %s30, 0
      %p171 = por %p169, %p170
      %p172 = scmp.ne.s32.totalorder %s158, %s159
      %p173 = scmp.eq.s32.totalorder %s31, 2
      %p174 = por %p172, %p173
      %p176 = scmp.ne.s32.totalorder %s159, %s175
      %p177 = scmp.eq.s32.totalorder %s31, 0
      %p178 = por %p176, %p177
      %p179 = scmp.le.s32.totalorder 1, %s25
      %p180 = scmp.lt.s32.totalorder %s25, 4
      %p181 = pnand %p179, %p180
      %p182 = pneg %p181
      // Predicated region
      $region9: #{tpu_custom_call.1} parent=5 // pred_check
        _
      $region10: #{tpu_custom_call.1} parent=5 // pred_check_branch
        %184 = sbr.rel (%p181) target = $region12
      $region11: #{tpu_custom_call.1} parent=5 // pred_region
        %s185 = ssub.s32 %s25, 1
        // Predicated region
        $region13: #{tpu_custom_call.1} parent=11 // pred_check
          %p186 = pneg %p98
        $region14: #{tpu_custom_call.1} parent=11 // pred_check_branch
          %188 = sbr.rel (%p186) target = $region16
        $region15: #{tpu_custom_call.1} parent=11 // pred_region
          %s190 = ssub.s32 384, 384
          %191 = vsyncadd [#allocation6], %s190
          %s192 = sshll.u32 [#allocation7], 4
          %s193 = int_to_ptr.vmem [resolvable:$true] %s192
          %198 = dma.hbm_to_vmem [thread:$0]  %s2, 384, %s193, [#allocation6], 128, 128, 8
        $region16: #{tpu_custom_call.1} parent=11 // pred_fallthru
          _
        // Predicated region
        $region17: #{tpu_custom_call.1} parent=11 // pred_check
          %p199 = pneg %p119
        $region18: #{tpu_custom_call.1} parent=11 // pred_check_branch
          %201 = sbr.rel (%p199) target = $region20
        $region19: #{tpu_custom_call.1} parent=11 // pred_region
          %s203 = ssub.s32 384, 384
          %204 = vsyncadd [#allocation9], %s203
          %s205 = sshll.u32 [#allocation8], 4
          %s206 = int_to_ptr.vmem [resolvable:$true] %s205
          %211 = dma.hbm_to_vmem [thread:$0]  %s3, 384, %s206, [#allocation9], 128, 128, 8
        $region20: #{tpu_custom_call.1} parent=11 // pred_fallthru
          _
      $region12: #{tpu_custom_call.1} parent=5 // pred_fallthru
        _
      %p212 = scmp.lt.s32.totalorder %s25, 3
      // Predicated region
      $region21: #{tpu_custom_call.1} parent=5 // pred_check
        %p213 = pneg %p212
      $region22: #{tpu_custom_call.1} parent=5 // pred_check_branch
        %215 = sbr.rel (%p213) target = $region24
      $region23: #{tpu_custom_call.1} parent=5 // pred_region
        // Predicated region
        $region25: #{tpu_custom_call.1} parent=23 // pred_check
          %p216 = pneg %p45
        $region26: #{tpu_custom_call.1} parent=23 // pred_check_branch
          %218 = sbr.rel (%p216) target = $region28
        $region27: #{tpu_custom_call.1} parent=23 // pred_region
          %s219 = sand.u32 %s35, 1
          %s220 = scalar_lea.sflag [#allocation3], %s219
          %s221 = sand.u32 %s35, 1
          %s222 = smul.addr %s221, 24
          %s223 = scalar_lea.vmem [#allocation2], %s222
          %s225 = ssub.s32 384, 384
          %226 = vsyncadd %s220, %s225
          %s227 = smul.addr %s25, 3
          %s228 = smul.addr %s227, 128
          %s229 = scalar_lea.hbm %s0, %s228
          %s230 = sshll.u32 %s223, 4
          %s231 = int_to_ptr.vmem [resolvable:$true] %s230
          %236 = dma.hbm_to_vmem [thread:$0]  %s229, 384, %s231, %s220, 128, 128, 8
        $region28: #{tpu_custom_call.1} parent=23 // pred_fallthru
          _
        // Predicated region
        $region29: #{tpu_custom_call.1} parent=23 // pred_check
          %p237 = pneg %p71
        $region30: #{tpu_custom_call.1} parent=23 // pred_check_branch
          %239 = sbr.rel (%p237) target = $region32
        $region31: #{tpu_custom_call.1} parent=23 // pred_region
          %s240 = sand.u32 %s25, 1
          %s241 = scalar_lea.sflag [#allocation6], %s240
          %s242 = sand.u32 %s61, 1
          %s243 = smul.addr %s242, 24
          %s244 = scalar_lea.vmem [#allocation5], %s243
          %s246 = ssub.s32 384, 384
          %247 = vsyncadd %s241, %s246
          %s248 = smul.addr %s25, 3
          %s249 = smul.addr %s248, 128
          %s250 = scalar_lea.hbm %s1, %s249
          %s251 = sshll.u32 %s244, 4
          %s252 = int_to_ptr.vmem [resolvable:$true] %s251
          %257 = dma.hbm_to_vmem [thread:$0]  %s250, 384, %s252, %s241, 128, 128, 8
        $region32: #{tpu_custom_call.1} parent=23 // pred_fallthru
          _
      $region24: #{tpu_custom_call.1} parent=5 // pred_fallthru
        _
      %p258 = scmp.le.s32.totalorder 1, %s25
      %p259 = scmp.lt.s32.totalorder %s25, 4
      %p260 = pnand %p258, %p259
      %p261 = pneg %p260
      // Predicated region
      $region33: #{tpu_custom_call.1} parent=5 // pred_check
        _
      $region34: #{tpu_custom_call.1} parent=5 // pred_check_branch
        %263 = sbr.rel (%p260) target = $region36
      $region35: #{tpu_custom_call.1} parent=5 // pred_region
        %s264 = ssub.s32 %s25, 1
        %s265 = sand.u32 %s38, 1
        %s266 = scalar_lea.sflag [#allocation3], %s265
        %s267 = sand.u32 %s38, 1
        %s268 = smul.addr %s267, 24
        %s269 = scalar_lea.vmem [#allocation2], %s268
        // Predicated region
        $region37: #{tpu_custom_call.1} parent=35 // pred_check
          %p270 = pneg %p51
        $region38: #{tpu_custom_call.1} parent=35 // pred_check_branch
          %272 = sbr.rel (%p270) target = $region40
        $region39: #{tpu_custom_call.1} parent=35 // pred_region
          %273 = dma.done %s266, 384
        $region40: #{tpu_custom_call.1} parent=35 // pred_fallthru
          _
        %s274 = sand.u32 %s30, 1
        %s275 = scalar_lea.sflag [#allocation6], %s274
        %s276 = sand.u32 %s64, 1
        %s277 = smul.addr %s276, 24
        %s278 = scalar_lea.vmem [#allocation5], %s277
        // Predicated region
        $region41: #{tpu_custom_call.1} parent=35 // pred_check
          %p279 = pneg %p77
        $region42: #{tpu_custom_call.1} parent=35 // pred_check_branch
          %281 = sbr.rel (%p279) target = $region44
        $region43: #{tpu_custom_call.1} parent=35 // pred_region
          %282 = dma.done %s275, 384
        $region44: #{tpu_custom_call.1} parent=35 // pred_fallthru
          _
        // Predicated region
        $region45: #{tpu_custom_call.1} parent=35 // pred_check
          %p283 = pneg %p98
        $region46: #{tpu_custom_call.1} parent=35 // pred_check_branch
          %285 = sbr.rel (%p283) target = $region48
        $region47: #{tpu_custom_call.1} parent=35 // pred_region
          %286 = dma.done [#allocation6], 384
        $region48: #{tpu_custom_call.1} parent=35 // pred_fallthru
          _
        // Predicated region
        $region49: #{tpu_custom_call.1} parent=35 // pred_check
          %p287 = pneg %p119
        $region50: #{tpu_custom_call.1} parent=35 // pred_check_branch
          %289 = sbr.rel (%p287) target = $region52
        $region51: #{tpu_custom_call.1} parent=35 // pred_region
          %290 = dma.done [#allocation9], 384
        $region52: #{tpu_custom_call.1} parent=35 // pred_fallthru
          _
        %s291 = sand.u32 %s38, 1
        %s292 = scalar_lea.sflag [#allocation3], %s291
        %s293 = sand.u32 %s38, 1
        %s294 = smul.addr %s293, 24
        %s295 = scalar_lea.vmem [#allocation2], %s294
        %p296 = pneg %p51
        %p297 = pneg %p48
        %s298 = sand.u32 %s30, 1
        %s299 = scalar_lea.sflag [#allocation6], %s298
        %s300 = sand.u32 %s64, 1
        %s301 = smul.addr %s300, 24
        %s302 = scalar_lea.vmem [#allocation5], %s301
        %p303 = pneg %p77
        %p304 = pneg %p74
        %p305 = pneg %p98
        %p306 = pneg %p95
        %p307 = pneg %p119
        %p308 = pneg %p116
        %p309 = pneg %p145
        %p310 = pneg %p142
        %s311 = sand.u32 %s132, 1
        %s312 = scalar_lea.sflag [#allocation4], %s311
        %s313 = sand.u32 %s132, 1
        %s314 = smul.addr %s313, 24
        %s315 = scalar_lea.vmem [#allocation10], %s314
        %p316 = pneg %p171
        %p317 = pneg %p168
        %s318 = sand.u32 %s158, 1
        %s319 = scalar_lea.sflag [#allocation12], %s318
        %s320 = sand.u32 %s158, 1
        %s321 = smul.addr %s320, 24
        %s322 = scalar_lea.vmem [#allocation11], %s321
        %v323 = vld [vmem:[%s269] sm:$0xff]
        %v324 = vld [vmem:[%s269 + $0x8] sm:$0xff]
        %v325 = vld [vmem:[%s269 + $0x10] sm:$0x7]
        %v326 = vld [vmem:[#allocation7] sm:$0xff]
        %v327 = vld [vmem:[#allocation7 + $0x8] sm:$0xff]
        %v328 = vld [vmem:[#allocation7 + $0x10] sm:$0xff]
        %vm329 = vcmask 154624
        %v331 = vsel %vm329, %v326, 0
        %v334 = vsel %vm329, %v327, 0
        %v337 = vsel %vm329, %v328, 0
        %vm339 = vcmask 1042432
        %v341 = vsel %vm339, %v325, 0
        %343 = vmatprep.subr.mxu0 0.0
        %344 = vmatpush1.msra.mxu0 %v323
        %345 = vmatprep.subr.mxu0 0.0
        %346 = vmatpush1.msra.mxu0 %v324
        %347 = vmatprep.subr.mxu0 0.0
        %348 = vmatpush1.msra.mxu0 %v341
        %349 = vmatprep.subr.mxu0 0.0
        %350 = vmatpush1.msra.mxu0 0.0
        %351 = vmatprep.subr.mxu0 0.0
        %352 = vmatpush1.msra.mxu0 0.0
        %353 = vmatprep.subr.mxu0 0.0
        %354 = vmatpush1.msra.mxu0 0.0
        %355 = vmatprep.subr.mxu0 0.0
        %356 = vmatpush1.msra.mxu0 0.0
        %357 = vmatprep.subr.mxu0 0.0
        %358 = vmatpush1.msra.mxu0 0.0
        %359 = vmatprep.subr.mxu0 0.0
        %360 = vmatpush1.msra.mxu0 0.0
        %361 = vmatprep.subr.mxu0 0.0
        %362 = vmatpush1.msra.mxu0 0.0
        %363 = vmatprep.subr.mxu0 0.0
        %364 = vmatpush1.msra.mxu0 0.0
        %365 = vmatprep.subr.mxu0 0.0
        %366 = vmatpush1.msra.mxu0 0.0
        %367 = vmatprep.subr.mxu0 0.0
        %368 = vmatpush1.msra.mxu0 0.0
        %369 = vmatprep.subr.mxu0 0.0
        %370 = vmatpush1.msra.mxu0 0.0
        %371 = vmatprep.subr.mxu0 0.0
        %372 = vmatpush1.msra.mxu0 0.0
        %373 = vmatprep.subr.mxu0 0.0
        %374 = vmatpush1.msra.mxu0 0.0
        %375 = vmatprep.subr.mxu0 0.0
        %376 = vmatpush1.msra.mxu0 0.0
        %377 = vmatprep.subr.mxu0 0.0
        %378 = vmatpush1.msra.mxu0 0.0
        %379 = vmatprep.subr.mxu0 0.0
        %380 = vmatpush1.msra.mxu0 0.0
        %381 = vmatprep.subr.mxu0 0.0
        %382 = vmatpush1.msra.mxu0 0.0
        %383 = vmatprep.subr.mxu0 0.0
        %384 = vmatpush1.msra.mxu0 0.0
        %385 = vmatprep.subr.mxu0 0.0
        %386 = vmatpush1.msra.mxu0 0.0
        %387 = vmatprep.subr.mxu0 0.0
        %388 = vmatpush1.msra.mxu0 0.0
        %389 = vmatprep.subr.mxu0 0.0
        %390 = vmatpush1.msra.mxu0 0.0
        %391 = vmatprep.subr.mxu0 0.0
        %392 = vmatpush1.msra.mxu0 0.0
        %393 = vmatprep.subr.mxu0 0.0
        %394 = vmatpush1.msra.mxu0 0.0
        %395 = vmatprep.subr.mxu0 0.0
        %396 = vmatpush1.msra.mxu0 0.0
        %397 = vmatprep.subr.mxu0 0.0
        %398 = vmatpush1.msra.mxu0 0.0
        %399 = vmatprep.subr.mxu0 0.0
        %400 = vmatpush1.msra.mxu0 0.0
        %401 = vmatprep.subr.mxu0 0.0
        %402 = vmatpush1.msra.mxu0 0.0
        %403 = vmatprep.subr.mxu0 0.0
        %404 = vmatpush1.msra.mxu0 0.0
        %405 = vmatprep.subr.mxu0 0.0
        %406 = vmatpush1.msra.mxu0 0.0
        %407 = vmatprep.mubr.f32.mxu0 0.0
        %408 = vmatmul.mubr.f32.gmra.mrb[0].mxu0 %v331
        %v409 = vpop.f32.mrb[0].mxu0
        %v410 = vadd.f32 0.0, %v409
        %v411 = vpop.f32.mrb[0].mxu0
        %412 = vmatprep.mubr.f32.mxu0 0.0
        %413 = vmatmul.mubr.f32.gmra.mrb[0].mxu0 %v334
        %v414 = vpop.f32.mrb[0].mxu0
        %v415 = vadd.f32 0.0, %v414
        %v416 = vpop.f32.mrb[0].mxu0
        %417 = vmatprep.mubr.f32.mxu0 0.0
        %418 = vmatmul.mubr.f32.gmra.mrb[0].mxu0 %v337
        %v419 = vpop.f32.mrb[0].mxu0
        %v420 = vadd.f32 0.0, %v419
        %v421 = vpop.f32.mrb[0].mxu0
        %422 = vdwg.mxu0
        %v423 = vld [vmem:[#allocation8] sm:$0xff]
        %v424 = vld [vmem:[#allocation8 + $0x8] sm:$0xff]
        %v425 = vld [vmem:[#allocation8 + $0x10] sm:$0x7f]
        %vm426 = vcmask 187392
        %v428 = vsel %vm426, %v410, 0
        %v431 = vsel %vm426, %v415, 0
        %v434 = vsel %vm426, %v420, 0
        %vm436 = vcmask 1046528
        %v438 = vsel %vm436, %v425, 0
        %440 = vmatprep.subr.mxu0 0.0
        %441 = vmatpush1.msra.mxu0 %v423
        %442 = vmatprep.subr.mxu0 0.0
        %443 = vmatpush1.msra.mxu0 %v424
        %444 = vmatprep.subr.mxu0 0.0
        %445 = vmatpush1.msra.mxu0 %v438
        %446 = vmatprep.subr.mxu0 0.0
        %447 = vmatpush1.msra.mxu0 0.0
        %448 = vmatprep.subr.mxu0 0.0
        %449 = vmatpush1.msra.mxu0 0.0
        %450 = vmatprep.subr.mxu0 0.0
        %451 = vmatpush1.msra.mxu0 0.0
        %452 = vmatprep.subr.mxu0 0.0
        %453 = vmatpush1.msra.mxu0 0.0
        %454 = vmatprep.subr.mxu0 0.0
        %455 = vmatpush1.msra.mxu0 0.0
        %456 = vmatprep.subr.mxu0 0.0
        %457 = vmatpush1.msra.mxu0 0.0
        %458 = vmatprep.subr.mxu0 0.0
        %459 = vmatpush1.msra.mxu0 0.0
        %460 = vmatprep.subr.mxu0 0.0
        %461 = vmatpush1.msra.mxu0 0.0
        %462 = vmatprep.subr.mxu0 0.0
        %463 = vmatpush1.msra.mxu0 0.0
        %464 = vmatprep.subr.mxu0 0.0
        %465 = vmatpush1.msra.mxu0 0.0
        %466 = vmatprep.subr.mxu0 0.0
        %467 = vmatpush1.msra.mxu0 0.0
        %468 = vmatprep.subr.mxu0 0.0
        %469 = vmatpush1.msra.mxu0 0.0
        %470 = vmatprep.subr.mxu0 0.0
        %471 = vmatpush1.msra.mxu0 0.0
        %472 = vmatprep.subr.mxu0 0.0
        %473 = vmatpush1.msra.mxu0 0.0
        %474 = vmatprep.subr.mxu0 0.0
        %475 = vmatpush1.msra.mxu0 0.0
        %476 = vmatprep.subr.mxu0 0.0
        %477 = vmatpush1.msra.mxu0 0.0
        %478 = vmatprep.subr.mxu0 0.0
        %479 = vmatpush1.msra.mxu0 0.0
        %480 = vmatprep.subr.mxu0 0.0
        %481 = vmatpush1.msra.mxu0 0.0
        %482 = vmatprep.subr.mxu0 0.0
        %483 = vmatpush1.msra.mxu0 0.0
        %484 = vmatprep.subr.mxu0 0.0
        %485 = vmatpush1.msra.mxu0 0.0
        %486 = vmatprep.subr.mxu0 0.0
        %487 = vmatpush1.msra.mxu0 0.0
        %488 = vmatprep.subr.mxu0 0.0
        %489 = vmatpush1.msra.mxu0 0.0
        %490 = vmatprep.subr.mxu0 0.0
        %491 = vmatpush1.msra.mxu0 0.0
        %492 = vmatprep.subr.mxu0 0.0
        %493 = vmatpush1.msra.mxu0 0.0
        %494 = vmatprep.subr.mxu0 0.0
        %495 = vmatpush1.msra.mxu0 0.0
        %496 = vmatprep.subr.mxu0 0.0
        %497 = vmatpush1.msra.mxu0 0.0
        %498 = vmatprep.subr.mxu0 0.0
        %499 = vmatpush1.msra.mxu0 0.0
        %500 = vmatprep.subr.mxu0 0.0
        %501 = vmatpush1.msra.mxu0 0.0
        %502 = vmatprep.subr.mxu0 0.0
        %503 = vmatpush1.msra.mxu0 0.0
        %504 = vmatprep.mubr.f32.mxu0 0.0
        %505 = vmatmul.mubr.f32.gmra.mrb[0].mxu0 %v428
        %v506 = vpop.f32.mrb[0].mxu0
        %v507 = vadd.f32 0.0, %v506
        %v508 = vpop.f32.mrb[0].mxu0
        %509 = vmatprep.mubr.f32.mxu0 0.0
        %510 = vmatmul.mubr.f32.gmra.mrb[0].mxu0 %v431
        %v511 = vpop.f32.mrb[0].mxu0
        %v512 = vadd.f32 0.0, %v511
        %v513 = vpop.f32.mrb[0].mxu0
        %514 = vmatprep.mubr.f32.mxu0 0.0
        %515 = vmatmul.mubr.f32.gmra.mrb[0].mxu0 %v434
        %v516 = vpop.f32.mrb[0].mxu0
        %v517 = vadd.f32 0.0, %v516
        %v518 = vpop.f32.mrb[0].mxu0
        %519 = vdwg.mxu0
        %vm520 = vcmask 261120
        %521 = vst.msk [vmem:[%s315] sm:$0xff] %vm520, %v507
        %522 = vst.msk [vmem:[%s315 + $0x8] sm:$0xff] %vm520, %v512
        %523 = vst.msk [vmem:[%s315 + $0x10] sm:$0xff] %vm520, %v517
        %v524 = vld [vmem:[%s278] sm:$0xff]
        %v525 = vld [vmem:[%s278 + $0x8] sm:$0xff]
        %v526 = vld [vmem:[%s278 + $0x10] sm:$0x7]
        %v527 = vld [vmem:[#allocation7] sm:$0xff]
        %v528 = vld [vmem:[#allocation7 + $0x8] sm:$0xff]
        %v529 = vld [vmem:[#allocation7 + $0x10] sm:$0xff]
        %v531 = vsel %vm329, %v527, 0
        %v534 = vsel %vm329, %v528, 0
        %v537 = vsel %vm329, %v529, 0
        %v540 = vsel %vm339, %v526, 0
        %542 = vmatprep.subr.mxu0 0.0
        %543 = vmatpush1.msra.mxu0 %v524
        %544 = vmatprep.subr.mxu0 0.0
        %545 = vmatpush1.msra.mxu0 %v525
        %546 = vmatprep.subr.mxu0 0.0
        %547 = vmatpush1.msra.mxu0 %v540
        %548 = vmatprep.subr.mxu0 0.0
        %549 = vmatpush1.msra.mxu0 0.0
        %550 = vmatprep.subr.mxu0 0.0
        %551 = vmatpush1.msra.mxu0 0.0
        %552 = vmatprep.subr.mxu0 0.0
        %553 = vmatpush1.msra.mxu0 0.0
        %554 = vmatprep.subr.mxu0 0.0
        %555 = vmatpush1.msra.mxu0 0.0
        %556 = vmatprep.subr.mxu0 0.0
        %557 = vmatpush1.msra.mxu0 0.0
        %558 = vmatprep.subr.mxu0 0.0
        %559 = vmatpush1.msra.mxu0 0.0
        %560 = vmatprep.subr.mxu0 0.0
        %561 = vmatpush1.msra.mxu0 0.0
        %562 = vmatprep.subr.mxu0 0.0
        %563 = vmatpush1.msra.mxu0 0.0
        %564 = vmatprep.subr.mxu0 0.0
        %565 = vmatpush1.msra.mxu0 0.0
        %566 = vmatprep.subr.mxu0 0.0
        %567 = vmatpush1.msra.mxu0 0.0
        %568 = vmatprep.subr.mxu0 0.0
        %569 = vmatpush1.msra.mxu0 0.0
        %570 = vmatprep.subr.mxu0 0.0
        %571 = vmatpush1.msra.mxu0 0.0
        %572 = vmatprep.subr.mxu0 0.0
        %573 = vmatpush1.msra.mxu0 0.0
        %574 = vmatprep.subr.mxu0 0.0
        %575 = vmatpush1.msra.mxu0 0.0
        %576 = vmatprep.subr.mxu0 0.0
        %577 = vmatpush1.msra.mxu0 0.0
        %578 = vmatprep.subr.mxu0 0.0
        %579 = vmatpush1.msra.mxu0 0.0
        %580 = vmatprep.subr.mxu0 0.0
        %581 = vmatpush1.msra.mxu0 0.0
        %582 = vmatprep.subr.mxu0 0.0
        %583 = vmatpush1.msra.mxu0 0.0
        %584 = vmatprep.subr.mxu0 0.0
        %585 = vmatpush1.msra.mxu0 0.0
        %586 = vmatprep.subr.mxu0 0.0
        %587 = vmatpush1.msra.mxu0 0.0
        %588 = vmatprep.subr.mxu0 0.0
        %589 = vmatpush1.msra.mxu0 0.0
        %590 = vmatprep.subr.mxu0 0.0
        %591 = vmatpush1.msra.mxu0 0.0
        %592 = vmatprep.subr.mxu0 0.0
        %593 = vmatpush1.msra.mxu0 0.0
        %594 = vmatprep.subr.mxu0 0.0
        %595 = vmatpush1.msra.mxu0 0.0
        %596 = vmatprep.subr.mxu0 0.0
        %597 = vmatpush1.msra.mxu0 0.0
        %598 = vmatprep.subr.mxu0 0.0
        %599 = vmatpush1.msra.mxu0 0.0
        %600 = vmatprep.subr.mxu0 0.0
        %601 = vmatpush1.msra.mxu0 0.0
        %602 = vmatprep.subr.mxu0 0.0
        %603 = vmatpush1.msra.mxu0 0.0
        %604 = vmatprep.subr.mxu0 0.0
        %605 = vmatpush1.msra.mxu0 0.0
        %606 = vmatprep.mubr.f32.mxu0 0.0
        %607 = vmatmul.mubr.f32.gmra.mrb[0].mxu0 %v531
        %v608 = vpop.f32.mrb[0].mxu0
        %v609 = vadd.f32 0.0, %v608
        %v610 = vpop.f32.mrb[0].mxu0
        %611 = vmatprep.mubr.f32.mxu0 0.0
        %612 = vmatmul.mubr.f32.gmra.mrb[0].mxu0 %v534
        %v613 = vpop.f32.mrb[0].mxu0
        %v614 = vadd.f32 0.0, %v613
        %v615 = vpop.f32.mrb[0].mxu0
        %616 = vmatprep.mubr.f32.mxu0 0.0
        %617 = vmatmul.mubr.f32.gmra.mrb[0].mxu0 %v537
        %v618 = vpop.f32.mrb[0].mxu0
        %v619 = vadd.f32 0.0, %v618
        %v620 = vpop.f32.mrb[0].mxu0
        %621 = vdwg.mxu0
        %v622 = vld [vmem:[#allocation8] sm:$0xff]
        %v623 = vld [vmem:[#allocation8 + $0x8] sm:$0xff]
        %v624 = vld [vmem:[#allocation8 + $0x10] sm:$0x7f]
        %v626 = vsel %vm426, %v609, 0
        %v629 = vsel %vm426, %v614, 0
        %v632 = vsel %vm426, %v619, 0
        %v635 = vsel %vm436, %v624, 0
        %637 = vmatprep.subr.mxu0 0.0
        %638 = vmatpush1.msra.mxu0 %v622
        %639 = vmatprep.subr.mxu0 0.0
        %640 = vmatpush1.msra.mxu0 %v623
        %641 = vmatprep.subr.mxu0 0.0
        %642 = vmatpush1.msra.mxu0 %v635
        %643 = vmatprep.subr.mxu0 0.0
        %644 = vmatpush1.msra.mxu0 0.0
        %645 = vmatprep.subr.mxu0 0.0
        %646 = vmatpush1.msra.mxu0 0.0
        %647 = vmatprep.subr.mxu0 0.0
        %648 = vmatpush1.msra.mxu0 0.0
        %649 = vmatprep.subr.mxu0 0.0
        %650 = vmatpush1.msra.mxu0 0.0
        %651 = vmatprep.subr.mxu0 0.0
        %652 = vmatpush1.msra.mxu0 0.0
        %653 = vmatprep.subr.mxu0 0.0
        %654 = vmatpush1.msra.mxu0 0.0
        %655 = vmatprep.subr.mxu0 0.0
        %656 = vmatpush1.msra.mxu0 0.0
        %657 = vmatprep.subr.mxu0 0.0
        %658 = vmatpush1.msra.mxu0 0.0
        %659 = vmatprep.subr.mxu0 0.0
        %660 = vmatpush1.msra.mxu0 0.0
        %661 = vmatprep.subr.mxu0 0.0
        %662 = vmatpush1.msra.mxu0 0.0
        %663 = vmatprep.subr.mxu0 0.0
        %664 = vmatpush1.msra.mxu0 0.0
        %665 = vmatprep.subr.mxu0 0.0
        %666 = vmatpush1.msra.mxu0 0.0
        %667 = vmatprep.subr.mxu0 0.0
        %668 = vmatpush1.msra.mxu0 0.0
        %669 = vmatprep.subr.mxu0 0.0
        %670 = vmatpush1.msra.mxu0 0.0
        %671 = vmatprep.subr.mxu0 0.0
        %672 = vmatpush1.msra.mxu0 0.0
        %673 = vmatprep.subr.mxu0 0.0
        %674 = vmatpush1.msra.mxu0 0.0
        %675 = vmatprep.subr.mxu0 0.0
        %676 = vmatpush1.msra.mxu0 0.0
        %677 = vmatprep.subr.mxu0 0.0
        %678 = vmatpush1.msra.mxu0 0.0
        %679 = vmatprep.subr.mxu0 0.0
        %680 = vmatpush1.msra.mxu0 0.0
        %681 = vmatprep.subr.mxu0 0.0
        %682 = vmatpush1.msra.mxu0 0.0
        %683 = vmatprep.subr.mxu0 0.0
        %684 = vmatpush1.msra.mxu0 0.0
        %685 = vmatprep.subr.mxu0 0.0
        %686 = vmatpush1.msra.mxu0 0.0
        %687 = vmatprep.subr.mxu0 0.0
        %688 = vmatpush1.msra.mxu0 0.0
        %689 = vmatprep.subr.mxu0 0.0
        %690 = vmatpush1.msra.mxu0 0.0
        %691 = vmatprep.subr.mxu0 0.0
        %692 = vmatpush1.msra.mxu0 0.0
        %693 = vmatprep.subr.mxu0 0.0
        %694 = vmatpush1.msra.mxu0 0.0
        %695 = vmatprep.subr.mxu0 0.0
        %696 = vmatpush1.msra.mxu0 0.0
        %697 = vmatprep.subr.mxu0 0.0
        %698 = vmatpush1.msra.mxu0 0.0
        %699 = vmatprep.subr.mxu0 0.0
        %700 = vmatpush1.msra.mxu0 0.0
        %701 = vmatprep.mubr.f32.mxu0 0.0
        %702 = vmatmul.mubr.f32.gmra.mrb[0].mxu0 %v626
        %v703 = vpop.f32.mrb[0].mxu0
        %v704 = vadd.f32 0.0, %v703
        %v705 = vpop.f32.mrb[0].mxu0
        %706 = vmatprep.mubr.f32.mxu0 0.0
        %707 = vmatmul.mubr.f32.gmra.mrb[0].mxu0 %v629
        %v708 = vpop.f32.mrb[0].mxu0
        %v709 = vadd.f32 0.0, %v708
        %v710 = vpop.f32.mrb[0].mxu0
        %711 = vmatprep.mubr.f32.mxu0 0.0
        %712 = vmatmul.mubr.f32.gmra.mrb[0].mxu0 %v632
        %v713 = vpop.f32.mrb[0].mxu0
        %v714 = vadd.f32 0.0, %v713
        %v715 = vpop.f32.mrb[0].mxu0
        %716 = vdwg.mxu0
        %717 = vst.msk [vmem:[%s322] sm:$0xff] %vm520, %v704
        %718 = vst.msk [vmem:[%s322 + $0x8] sm:$0xff] %vm520, %v709
        %719 = vst.msk [vmem:[%s322 + $0x10] sm:$0xff] %vm520, %v714
        %s720 = sand.u32 %s132, 1
        %s721 = scalar_lea.sflag [#allocation4], %s720
        %s722 = sand.u32 %s132, 1
        %s723 = smul.addr %s722, 24
        %s724 = scalar_lea.vmem [#allocation10], %s723
        %s725 = sand.u32 %s158, 1
        %s726 = scalar_lea.sflag [#allocation12], %s725
        %s727 = sand.u32 %s158, 1
        %s728 = smul.addr %s727, 24
        %s729 = scalar_lea.vmem [#allocation11], %s728
        // Predicated region
        $region53: #{tpu_custom_call.1} parent=35 // pred_check
          %p730 = pneg %p142
        $region54: #{tpu_custom_call.1} parent=35 // pred_check_branch
          %732 = sbr.rel (%p730) target = $region56
        $region55: #{tpu_custom_call.1} parent=35 // pred_region
          %s734 = ssub.s32 384, 384
          %735 = vsyncadd %s721, %s734
          %s736 = smul.addr %s30, 3
          %s737 = smul.addr %s736, 128
          %s738 = scalar_lea.hbm %s4, %s737
          %s739 = sshll.u32 %s724, 4
          %s740 = int_to_ptr.vmem [resolvable:$true] %s739
          %745 = dma.vmem_to_hbm [thread:$0]  %s740, 384, %s738, %s721, 128, 128, 8
        $region56: #{tpu_custom_call.1} parent=35 // pred_fallthru
          _
        // Predicated region
        $region57: #{tpu_custom_call.1} parent=35 // pred_check
          %p746 = pneg %p168
        $region58: #{tpu_custom_call.1} parent=35 // pred_check_branch
          %748 = sbr.rel (%p746) target = $region60
        $region59: #{tpu_custom_call.1} parent=35 // pred_region
          %s750 = ssub.s32 384, 384
          %751 = vsyncadd %s726, %s750
          %s752 = smul.addr %s30, 3
          %s753 = smul.addr %s752, 128
          %s754 = scalar_lea.hbm %s5, %s753
          %s755 = sshll.u32 %s729, 4
          %s756 = int_to_ptr.vmem [resolvable:$true] %s755
          %761 = dma.vmem_to_hbm [thread:$0]  %s756, 384, %s754, %s726, 128, 128, 8
        $region60: #{tpu_custom_call.1} parent=35 // pred_fallthru
          _
      $region36: #{tpu_custom_call.1} parent=5 // pred_fallthru
        _
      %p762 = scmp.le.s32.totalorder 2, %s25
      // Predicated region
      $region61: #{tpu_custom_call.1} parent=5 // pred_check
        %p763 = pneg %p762
      $region62: #{tpu_custom_call.1} parent=5 // pred_check_branch
        %765 = sbr.rel (%p763) target = $region64
      $region63: #{tpu_custom_call.1} parent=5 // pred_region
        %s766 = ssub.s32 %s25, 2
        // Predicated region
        $region65: #{tpu_custom_call.1} parent=63 // pred_check
          %p767 = pneg %p148
        $region66: #{tpu_custom_call.1} parent=63 // pred_check_branch
          %769 = sbr.rel (%p767) target = $region68
        $region67: #{tpu_custom_call.1} parent=63 // pred_region
          %s770 = sand.u32 %s133, 1
          %s771 = scalar_lea.sflag [#allocation4], %s770
          %s772 = sand.u32 %s133, 1
          %s773 = smul.addr %s772, 24
          %s774 = scalar_lea.vmem [#allocation10], %s773
          %775 = dma.done %s771, 384
        $region68: #{tpu_custom_call.1} parent=63 // pred_fallthru
          _
        // Predicated region
        $region69: #{tpu_custom_call.1} parent=63 // pred_check
          %p776 = pneg %p174
        $region70: #{tpu_custom_call.1} parent=63 // pred_check_branch
          %778 = sbr.rel (%p776) target = $region72
        $region71: #{tpu_custom_call.1} parent=63 // pred_region
          %s779 = sand.u32 %s159, 1
          %s780 = scalar_lea.sflag [#allocation12], %s779
          %s781 = sand.u32 %s159, 1
          %s782 = smul.addr %s781, 24
          %s783 = scalar_lea.vmem [#allocation11], %s782
          %784 = dma.done %s780, 384
        $region72: #{tpu_custom_call.1} parent=63 // pred_fallthru
          _
      $region64: #{tpu_custom_call.1} parent=5 // pred_fallthru
        _
    $region6: #{tpu_custom_call.1} parent=1 // loop_footer
      %s29 = sadd.s32 1, %s25
    $region7: #{tpu_custom_call.1} parent=1 // loop_footer_branch
      %24 = sbr.rel target = $region3
    $region8: #{tpu_custom_call.1} parent=1 // loop_exit
      _
    %785 = vsyncpa [#allocation3], 1
    %s786 = scalar_lea.sflag [#allocation3], 1
    %787 = vsyncpa %s786, 1
    %788 = vsyncpa [#allocation6], 1
    %s789 = scalar_lea.sflag [#allocation6], 1
    %790 = vsyncpa %s789, 1
    %791 = vsyncpa [#allocation9], 1
    %792 = vsyncpa [#allocation4], 1
    %s793 = scalar_lea.sflag [#allocation4], 1
    %794 = vsyncpa %s793, 1
    %795 = vsyncpa [#allocation12], 1
    %s796 = scalar_lea.sflag [#allocation12], 1
    %797 = vsyncpa %s796, 1

</llo_original>
